<compile_context>
chip_gen: v6e
topology: v6e:2x2x1
jax: 0.10.0
libtpu: 0.0.40
codegen_flags: <defaults>
</compile_context>

<pallas_src>
import functools

import numpy as np
import jax
import jax.numpy as jnp
from jax.experimental import pallas as pl
from jax.experimental.pallas import tpu as pltpu


# ---------------------------------------------------------------------------
# Deterministic parameter construction (replicates init_fourier_ for ks=1,
# init=None -> weights are exactly the ortho inverse-DFT matrices).
# ---------------------------------------------------------------------------
def fourier_weight_flat(N, dtype=np.float32):
    """Conv2d(2, 2*N, (N,1)) IDFT weight flattened to [2*N, 2*N].

    Row index o = c_out*N + k  (c_out in {0:real, 1:imag}),
    col index c = c_in*N + n   (c_in  in {0:real, 1:imag}).
    """
    k = np.arange(N)[:, None].astype(np.float64)
    n = np.arange(N)[None, :].astype(np.float64)
    ang = 2.0 * np.pi * n * k / N
    w = np.zeros((2 * N, 2, N), dtype=np.float64)
    w[:N, 0, :] = np.cos(ang)
    w[:N, 1, :] = -np.sin(ang)
    w[N:, 0, :] = np.sin(ang)
    w[N:, 1, :] = np.cos(ang)
    w = w / np.sqrt(N)                      # norm='ortho'
    return w.reshape(2 * N, 2 * N).astype(dtype)


# ---------------------------------------------------------------------------
# Host/wrapper-side weight preprocessing (layout plumbing, one-time).
#   Flat index conventions (all row-major / NCHW-consistent):
#     input  x_flat[b, (ci, n, w)]          = X[b, ci, n, w]
#     mid    t_flat[b, (c,  k, w)]          = x_t[b, c*nrow+k, w]
#     output o_flat[b, (o', r, m)]          = out[b, o', r, m]
# ---------------------------------------------------------------------------
def expand_w1(w1_flat, nch_in, nch_int, nrow, ncol):
    """W1big[(ci,n,v),(c,k,w)] = W1[(c,k),(ci,n)] * delta(v,w)."""
    w1 = w1_flat.reshape(nch_int, nrow, nch_in, nrow)            # [o,k,i,n]
    eye = jnp.eye(ncol, dtype=w1.dtype)
    big = jnp.einsum("okin,vw->invokw", w1, eye)
    return big.reshape(nch_in * nrow * ncol, nch_int * nrow * ncol)


def expand_w2(w2_flat, nch_int, nch_out, nrow, ncol):
    """W2big[(c,k,w),(o',r,m)] = W2[(o',m),(c,w)] * delta(k,r)."""
    w2 = w2_flat.reshape(nch_out, ncol, nch_int, ncol)           # [p,m,c,w]
    eye = jnp.eye(nrow, dtype=w2.dtype)
    big = jnp.einsum("pmcw,kr->ckwprm", w2, eye)
    return big.reshape(nch_int * nrow * ncol, nch_out * nrow * ncol)


def fused_weight(w1_flat, w2_flat, nch_in, nch_int, nch_out, nrow, ncol):
    """Wf[(ci,n,v),(o',r,m)] = sum_c W1[(c,r),(ci,n)] * W2[(o',m),(c,v)].

    Composition of transform-1, the (0,1,3,2) permute, and transform-2.
    Only valid when nl is None (no elementwise op in between).
    """
    w1 = w1_flat.reshape(nch_int, nrow, nch_in, nrow)            # [c,r,i,n]
    w2 = w2_flat.reshape(nch_out, ncol, nch_int, ncol)           # [p,m,c,v]
    wf = jnp.einsum("crin,pmcv->invprm", w1, w2)
    return wf.reshape(nch_in * nrow * ncol, nch_out * nrow * ncol)


# ---------------------------------------------------------------------------
# Pallas kernels: one batch tile (Bt rows, feature-flat lanes) per grid step.
# ---------------------------------------------------------------------------
def _fused_kernel(x_ref, w_ref, o_ref):
    # x_ref: [Bt, Din], w_ref: [Din, Dout], o_ref: [Bt, Dout].  Single MXU matmul.
    o_ref[...] = jnp.dot(
        x_ref[...], w_ref[...], preferred_element_type=jnp.float32
    ).astype(o_ref.dtype)


def _two_stage_kernel(x_ref, w1_ref, w2_ref, o_ref, *, nl):
    # x_ref: [Bt, Din], w1_ref: [Din, Dmid], w2_ref: [Dmid, Dout].
    t = jnp.dot(x_ref[...], w1_ref[...], preferred_element_type=jnp.float32)
    # nl is elementwise, so applying it here (pre logical permute, which is
    # already folded into W1big/W2big) matches the PyTorch module exactly.
    if nl == "tanh":
        t = jnp.tanh(t)
    elif nl == "relu":
        t = jnp.maximum(t, 0.0)
    elif nl == "sigmoid":
        t = jax.nn.sigmoid(t)
    else:
        raise ValueError(f"unsupported nl: {nl}")
    o_ref[...] = jnp.dot(
        t.astype(w2_ref.dtype), w2_ref[...], preferred_element_type=jnp.float32
    ).astype(o_ref.dtype)


# ---------------------------------------------------------------------------
# Wrapper
# ---------------------------------------------------------------------------
def _batch_tiling(B):
    """Pick (padded batch, batch tile).  Single step for small B; 256-row
    tiles (multiple of 8 sublanes, enough per-step work) for large B."""
    if B <= 256:
        return B, B
    bt = 256
    bp = ((B + bt - 1) // bt) * bt
    return bp, bt


def generalised_ift2(x, w1_flat, w2_flat, *, nch_int, nch_out, nl=None):
    B, nch_in, nrow, ncol = x.shape
    din = nch_in * nrow * ncol
    dmid = nch_int * nrow * ncol
    dout = nch_out * nrow * ncol
    dtype = x.dtype
    itemsize = jnp.dtype(dtype).itemsize

    # Lane-dense, transpose-free layout: pure NCHW flatten.
    x_flat = x.reshape(B, din)
    bp, bt = _batch_tiling(B)
    if bp != B:
        x_flat = jnp.pad(x_flat, ((0, bp - B), (0, 0)))
    grid = (bp // bt,)

    cparams = pltpu.CompilerParams(dimension_semantics=("parallel",))
    # Note: weight BlockSpecs use a constant index_map so they are DMA'd once;
    # at these sizes (<= ~1 MiB each) double-buffering them is negligible.

    if nl is None:
        wf = fused_weight(w1_flat, w2_flat, nch_in, nch_int, nch_out,
                          nrow, ncol).astype(dtype)
        cost = pl.CostEstimate(
            flops=2 * bp * din * dout,
            transcendentals=0,
            bytes_accessed=(bp * din + din * dout + bp * dout) * itemsize,
        )
        out_flat = pl.pallas_call(
            _fused_kernel,
            out_shape=jax.ShapeDtypeStruct((bp, dout), dtype),
            grid_spec=pltpu.PrefetchScalarGridSpec(
                num_scalar_prefetch=0,
                grid=grid,
                in_specs=[
                    pl.BlockSpec((bt, din), lambda b: (b, 0)),
                    pl.BlockSpec((din, dout), lambda b: (0, 0)),
                ],
                out_specs=pl.BlockSpec((bt, dout), lambda b: (b, 0)),
            ),
            compiler_params=cparams,
            cost_estimate=cost,
        )(x_flat, wf)
    else:
        w1big = expand_w1(w1_flat, nch_in, nch_int, nrow, ncol).astype(dtype)
        w2big = expand_w2(w2_flat, nch_int, nch_out, nrow, ncol).astype(dtype)
        cost = pl.CostEstimate(
            flops=2 * bp * (din * dmid + dmid * dout),
            transcendentals=bp * dmid if nl in ("tanh", "sigmoid") else 0,
            bytes_accessed=(bp * din + din * dmid + dmid * dout
                            + bp * dout) * itemsize,
        )
        kernel = functools.partial(_two_stage_kernel, nl=nl)
        out_flat = pl.pallas_call(
            kernel,
            out_shape=jax.ShapeDtypeStruct((bp, dout), dtype),
            grid_spec=pltpu.PrefetchScalarGridSpec(
                num_scalar_prefetch=0,
                grid=grid,
                in_specs=[
                    pl.BlockSpec((bt, din), lambda b: (b, 0)),
                    pl.BlockSpec((din, dmid), lambda b: (0, 0)),
                    pl.BlockSpec((dmid, dout), lambda b: (0, 0)),
                ],
                out_specs=pl.BlockSpec((bt, dout), lambda b: (b, 0)),
            ),
            compiler_params=cparams,
            cost_estimate=cost,
        )(x_flat, w1big, w2big)

    # Pure reshape back to NCHW (no transpose needed — output flat ordering is
    # already (nch_out, nrow, ncol)).
    return out_flat[:B].reshape(B, nch_out, nrow, ncol)


# ---------------------------------------------------------------------------
# Pure-JAX reference (direct transliteration of the PyTorch forward, ks=1).
# ---------------------------------------------------------------------------
def ref_forward(x, w1_flat, w2_flat, *, nch_int, nch_out, nl=None):
    B, nch_in, nrow, ncol = x.shape
    xf = x.reshape(B, nch_in * nrow, ncol)
    t1 = jnp.einsum("oc,bcw->bow", w1_flat, xf)                 # conv1 (collapses H)
    t1 = t1.reshape(B, nch_int, nrow, ncol).transpose(0, 1, 3, 2)
    if nl == "tanh":
        t1 = jnp.tanh(t1)
    elif nl == "relu":
        t1 = jnp.maximum(t1, 0.0)
    elif nl == "sigmoid":
        t1 = jax.nn.sigmoid(t1)
    t1f = t1.reshape(B, nch_int * ncol, nrow)
    t2 = jnp.einsum("oc,bcr->bor", w2_flat, t1f)                # conv2
    return t2.reshape(B, nch_out, ncol, nrow).transpose(0, 1, 3, 2)


if __name__ == "__main__":
    # Module config: GeneralisedIFT2Layer(nrow=16, ncol=16, nch_in=2,
    #   kernel_size=1, init_fourier=True, init=None, bias=False) ->
    #   nch_int = nch_out = 2, weights are exact ortho inverse-DFT matrices.
    B, nch_in, nrow, ncol = 2, 2, 16, 16
    nch_int, nch_out = nch_in, nch_in

    key = jax.random.PRNGKey(0)
    x = jax.random.normal(key, (B, nch_in, nrow, ncol), dtype=jnp.float32)

    w1 = jnp.asarray(fourier_weight_flat(nrow))   # [nch_int*nrow, nch_in*nrow]
    w2 = jnp.asarray(fourier_weight_flat(ncol))   # [nch_out*ncol, nch_int*ncol]

    # --- nl=None (default Fourier config): fused single-matmul path ---
    out = generalised_ift2(x, w1, w2, nch_int=nch_int, nch_out=nch_out, nl=None)
    out = jax.block_until_ready(out)
    assert out.shape == (B, nch_out, nrow, ncol)

    ref = ref_forward(x, w1, w2, nch_int=nch_int, nch_out=nch_out, nl=None)
    np.testing.assert_allclose(np.asarray(out), np.asarray(ref),
                               rtol=1e-4, atol=1e-4)

    # Sanity: with Fourier init this layer is the orthonormal 2D inverse DFT.
    xc = np.asarray(x[:, 0]) + 1j * np.asarray(x[:, 1])
    ifft = np.fft.ifft2(xc, norm="ortho")
    np.testing.assert_allclose(np.asarray(out[:, 0]), ifft.real, rtol=1e-4, atol=1e-4)
    np.testing.assert_allclose(np.asarray(out[:, 1]), ifft.imag, rtol=1e-4, atol=1e-4)

    # --- nl paths: two-matmul kernel with permute folded into the weights ---
    for nl in ("tanh", "relu"):
        out_nl = generalised_ift2(x, w1, w2, nch_int=nch_int, nch_out=nch_out, nl=nl)
        out_nl = jax.block_until_ready(out_nl)
        ref_nl = ref_forward(x, w1, w2, nch_int=nch_int, nch_out=nch_out, nl=nl)
        np.testing.assert_allclose(np.asarray(out_nl), np.asarray(ref_nl),
                                   rtol=1e-4, atol=1e-4)

    print("KERNEL_OK")
</pallas_src>

<mosaic_0001>
module attributes {stable_mosaic.version = 11 : i64} {
  func.func @_fused_kernel(%arg0: i32, %arg1: memref<2x512xf32, #tpu.memory_space<vmem>>, %arg2: memref<512x512xf32, #tpu.memory_space<vmem>>, %arg3: memref<2x512xf32, #tpu.memory_space<vmem>>) attributes {dimension_semantics = [#tpu.dimension_semantics<parallel>], iteration_bounds = array<i64: 1>, scalar_prefetch = 0 : i64, scratch_operands = 0 : i64, tpu.core_type = #tpu.core_type<tc>, window_params = [{transform_indices = @transform_0, window_bounds = array<i64: 2, 512>}, {pipeline_mode = #tpu.pipeline_mode<synchronous>, transform_indices = @transform_1, window_bounds = array<i64: 512, 512>}, {transform_indices = @transform_2, window_bounds = array<i64: 2, 512>}]} {
    %c0 = arith.constant 0 : index
    %c0_0 = arith.constant 0 : index
    %0 = vector.load %arg1[%c0, %c0_0] : memref<2x512xf32, #tpu.memory_space<vmem>>, vector<2x512xf32>
    %c0_1 = arith.constant 0 : index
    %c0_2 = arith.constant 0 : index
    %1 = vector.load %arg2[%c0_1, %c0_2] : memref<512x512xf32, #tpu.memory_space<vmem>>, vector<512x512xf32>
    %cst = arith.constant dense<0.000000e+00> : vector<2x512xf32>
    %2 = tpu.matmul %0, %1, %cst {dimension_numbers = #tpu.dot_dimension_numbers<[1], [0], [0], [1], [0, 0, 1, 1], [], []>} : vector<2x512xf32>, vector<512x512xf32>, vector<2x512xf32> -> vector<2x512xf32>
    %c0_3 = arith.constant 0 : index
    %c0_4 = arith.constant 0 : index
    %3 = vector.load %arg3[%c0_3, %c0_4] : memref<2x512xf32, #tpu.memory_space<vmem>>, vector<2x512xf32>
    tpu.vector_store %arg3[%c0_3, %c0_4], %2 {strides = array<i32>} : memref<2x512xf32, #tpu.memory_space<vmem>>, vector<2x512xf32>,
    return
  }
  func.func @transform_0(%arg0: i32) -> (i32, i32) {
    %c0_i32 = arith.constant 0 : i32
    %c0_i32_0 = arith.constant 0 : i32
    return %arg0, %c0_i32 : i32, i32
  }
  func.func @transform_1(%arg0: i32) -> (i32, i32) {
    %c0_i32 = arith.constant 0 : i32
    %c0_i32_0 = arith.constant 0 : i32
    %c0_i32_1 = arith.constant 0 : i32
    return %c0_i32, %c0_i32_0 : i32, i32
  }
  func.func @transform_2(%arg0: i32) -> (i32, i32) {
    %c0_i32 = arith.constant 0 : i32
    %c0_i32_0 = arith.constant 0 : i32
    return %arg0, %c0_i32 : i32, i32
  }
}

</mosaic_0001>

<llo_original>
// kernel: tpu_custom_call.1
$region0: #{tpu_custom_call.1}
  #allocation0 [shape = 'u32[]', space=smem, size = 0x4, offset = 0x4, fixed_abs, tag = 'smem constant byte address 0x4 - core index']
  #allocation1 [shape = 'u32[144,128]{1,0:T(1,128)}', space=vmem, size = 0x12000, scoped, tag = 'internal scratch']
  %s0 = inlined_call_operand.hbm [shape: f32[2,512], index: 0, kind: input, shape index: {}]
  %s1 = inlined_call_operand.hbm [shape: f32[512,512], index: 1, kind: input, shape index: {}]
  %s2 = inlined_call_operand.hbm [shape: f32[2,512], index: 2, kind: output, shape index: {}]
  %s3 = sld [smem:[#allocation0]]
  $region26: #{tpu_custom_call.1} parent=0
    _
  %s5 = ssub.s32 1, %s3
  %s6 = scalar_select 0, %s5, %s3
  $region1: #{tpu_custom_call.1} parent=0
    #allocation2 [shape = 'u8[4096]{0}', space=vmem, size = 0x1000, scoped, tag = 'input window, operand 0, single buffered']
    #allocation3 [shape = 's32[1]{0}', space=sflag, size = 0x4, scoped, tag = 'scoped memory for tpu_custom_call.1']
    #allocation4 [shape = 's32[1]{0}', space=sflag, size = 0x4, scoped, tag = 'scoped memory for tpu_custom_call.1']
    #allocation5 [shape = 'u8[1048576]{0}', space=vmem, size = 0x100000, scoped, tag = 'input window, operand 1, single buffered']
    #allocation6 [shape = 's32[1]{0}', space=sflag, size = 0x4, scoped, tag = 'scoped memory for tpu_custom_call.1']
    #allocation7 [shape = 'u8[4096]{0}', space=vmem, size = 0x1000, scoped, tag = 'output window, operand 0, single buffered']
    %7 = vsyncpa [#allocation3], 0
    %8 = vsyncpa [#allocation6], 0
    %9 = vsyncpa [#allocation4], 0
    // Predicated region
    $region2: #{tpu_custom_call.1} parent=1 // pred_check
      _
    $region3: #{tpu_custom_call.1} parent=1 // pred_check_branch
      %11 = sbr.rel (0) target = $region5
    $region4: #{tpu_custom_call.1} parent=1 // pred_region
      %s13 = ssub.s32 128, 128
      %14 = vsyncadd [#allocation3], %s13
      %s16 = sshll.u32 [#allocation2], 4
      %s17 = int_to_ptr.vmem [resolvable:$true] %s16
      %19 = dma.hbm_to_vmem [thread:$0]  %s0, 128, %s17, [#allocation3]
    $region5: #{tpu_custom_call.1} parent=1 // pred_fallthru
      _
    // Predicated region
    $region6: #{tpu_custom_call.1} parent=1 // pred_check
      _
    $region7: #{tpu_custom_call.1} parent=1 // pred_check_branch
      %21 = sbr.rel (0) target = $region9
    $region8: #{tpu_custom_call.1} parent=1 // pred_region
      %s23 = ssub.s32 32768, 32768
      %24 = vsyncadd [#allocation6], %s23
      %s25 = sshll.u32 [#allocation5], 4
      %s26 = int_to_ptr.vmem [resolvable:$true] %s25
      %31 = dma.hbm_to_vmem [thread:$0]  %s1, 32768, %s26, [#allocation6], 512, 512, 32
    $region9: #{tpu_custom_call.1} parent=1 // pred_fallthru
      _
    // Predicated region
    $region10: #{tpu_custom_call.1} parent=1 // pred_check
      _
    $region11: #{tpu_custom_call.1} parent=1 // pred_check_branch
      %33 = sbr.rel (0) target = $region13
    $region12: #{tpu_custom_call.1} parent=1 // pred_region
      %34 = dma.done [#allocation3], 128
    $region13: #{tpu_custom_call.1} parent=1 // pred_fallthru
      _
    // Predicated region
    $region14: #{tpu_custom_call.1} parent=1 // pred_check
      _
    $region15: #{tpu_custom_call.1} parent=1 // pred_check_branch
      %36 = sbr.rel (0) target = $region17
    $region16: #{tpu_custom_call.1} parent=1 // pred_region
      %37 = dma.done [#allocation6], 32768
    $region17: #{tpu_custom_call.1} parent=1 // pred_fallthru
      _
    %v38 = vld [vmem:[#allocation2] sm:$0xff]
    %v39 = vld [vmem:[#allocation5] sm:$0xff]
    %v40 = vld [vmem:[#allocation5 + $0x8] sm:$0xff]
    %v41 = vld [vmem:[#allocation5 + $0x10] sm:$0xff]
    %v42 = vld [vmem:[#allocation5 + $0x18] sm:$0xff]
    %v43 = vld [vmem:[#allocation5 + $0x20] sm:$0xff]
    %v44 = vld [vmem:[#allocation5 + $0x28] sm:$0xff]
    %v45 = vld [vmem:[#allocation5 + $0x30] sm:$0xff]
    %v46 = vld [vmem:[#allocation5 + $0x38] sm:$0xff]
    %v47 = vld [vmem:[#allocation5 + $0x40] sm:$0xff]
    %v48 = vld [vmem:[#allocation5 + $0x48] sm:$0xff]
    %v49 = vld [vmem:[#allocation5 + $0x50] sm:$0xff]
    %v50 = vld [vmem:[#allocation5 + $0x58] sm:$0xff]
    %v51 = vld [vmem:[#allocation5 + $0x60] sm:$0xff]
    %v52 = vld [vmem:[#allocation5 + $0x68] sm:$0xff]
    %v53 = vld [vmem:[#allocation5 + $0x70] sm:$0xff]
    %v54 = vld [vmem:[#allocation5 + $0x78] sm:$0xff]
    %v55 = vld [vmem:[#allocation5 + $0x80] sm:$0xff]
    %v56 = vld [vmem:[#allocation5 + $0x88] sm:$0xff]
    %v57 = vld [vmem:[#allocation5 + $0x90] sm:$0xff]
    %v58 = vld [vmem:[#allocation5 + $0x98] sm:$0xff]
    %v59 = vld [vmem:[#allocation5 + $0xa0] sm:$0xff]
    %v60 = vld [vmem:[#allocation5 + $0xa8] sm:$0xff]
    %v61 = vld [vmem:[#allocation5 + $0xb0] sm:$0xff]
    %v62 = vld [vmem:[#allocation5 + $0xb8] sm:$0xff]
    %v63 = vld [vmem:[#allocation5 + $0xc0] sm:$0xff]
    %v64 = vld [vmem:[#allocation5 + $0xc8] sm:$0xff]
    %v65 = vld [vmem:[#allocation5 + $0xd0] sm:$0xff]
    %v66 = vld [vmem:[#allocation5 + $0xd8] sm:$0xff]
    %v67 = vld [vmem:[#allocation5 + $0xe0] sm:$0xff]
    %v68 = vld [vmem:[#allocation5 + $0xe8] sm:$0xff]
    %v69 = vld [vmem:[#allocation5 + $0xf0] sm:$0xff]
    %v70 = vld [vmem:[#allocation5 + $0xf8] sm:$0xff]
    %v71 = vld [vmem:[#allocation5 + $0x100] sm:$0xff]
    %v72 = vld [vmem:[#allocation5 + $0x108] sm:$0xff]
    %v73 = vld [vmem:[#allocation5 + $0x110] sm:$0xff]
    %v74 = vld [vmem:[#allocation5 + $0x118] sm:$0xff]
    %v75 = vld [vmem:[#allocation5 + $0x120] sm:$0xff]
    %v76 = vld [vmem:[#allocation5 + $0x128] sm:$0xff]
    %v77 = vld [vmem:[#allocation5 + $0x130] sm:$0xff]
    %v78 = vld [vmem:[#allocation5 + $0x138] sm:$0xff]
    %v79 = vld [vmem:[#allocation5 + $0x140] sm:$0xff]
    %v80 = vld [vmem:[#allocation5 + $0x148] sm:$0xff]
    %v81 = vld [vmem:[#allocation5 + $0x150] sm:$0xff]
    %v82 = vld [vmem:[#allocation5 + $0x158] sm:$0xff]
    %v83 = vld [vmem:[#allocation5 + $0x160] sm:$0xff]
    %v84 = vld [vmem:[#allocation5 + $0x168] sm:$0xff]
    %v85 = vld [vmem:[#allocation5 + $0x170] sm:$0xff]
    %v86 = vld [vmem:[#allocation5 + $0x178] sm:$0xff]
    %v87 = vld [vmem:[#allocation5 + $0x180] sm:$0xff]
    %v88 = vld [vmem:[#allocation5 + $0x188] sm:$0xff]
    %v89 = vld [vmem:[#allocation5 + $0x190] sm:$0xff]
    %v90 = vld [vmem:[#allocation5 + $0x198] sm:$0xff]
    %v91 = vld [vmem:[#allocation5 + $0x1a0] sm:$0xff]
    %v92 = vld [vmem:[#allocation5 + $0x1a8] sm:$0xff]
    %v93 = vld [vmem:[#allocation5 + $0x1b0] sm:$0xff]
    %v94 = vld [vmem:[#allocation5 + $0x1b8] sm:$0xff]
    %v95 = vld [vmem:[#allocation5 + $0x1c0] sm:$0xff]
    %v96 = vld [vmem:[#allocation5 + $0x1c8] sm:$0xff]
    %v97 = vld [vmem:[#allocation5 + $0x1d0] sm:$0xff]
    %v98 = vld [vmem:[#allocation5 + $0x1d8] sm:$0xff]
    %v99 = vld [vmem:[#allocation5 + $0x1e0] sm:$0xff]
    %v100 = vld [vmem:[#allocation5 + $0x1e8] sm:$0xff]
    %v101 = vld [vmem:[#allocation5 + $0x1f0] sm:$0xff]
    %v102 = vld [vmem:[#allocation5 + $0x1f8] sm:$0xff]
    %v103 = vld [vmem:[#allocation5 + $0x200] sm:$0xff]
    %v104 = vld [vmem:[#allocation5 + $0x208] sm:$0xff]
    %v105 = vld [vmem:[#allocation5 + $0x210] sm:$0xff]
    %v106 = vld [vmem:[#allocation5 + $0x218] sm:$0xff]
    %v107 = vld [vmem:[#allocation5 + $0x220] sm:$0xff]
    %v108 = vld [vmem:[#allocation5 + $0x228] sm:$0xff]
    %v109 = vld [vmem:[#allocation5 + $0x230] sm:$0xff]
    %v110 = vld [vmem:[#allocation5 + $0x238] sm:$0xff]
    %v111 = vld [vmem:[#allocation5 + $0x240] sm:$0xff]
    %v112 = vld [vmem:[#allocation5 + $0x248] sm:$0xff]
    %v113 = vld [vmem:[#allocation5 + $0x250] sm:$0xff]
    %v114 = vld [vmem:[#allocation5 + $0x258] sm:$0xff]
    %v115 = vld [vmem:[#allocation5 + $0x260] sm:$0xff]
    %v116 = vld [vmem:[#allocation5 + $0x268] sm:$0xff]
    %v117 = vld [vmem:[#allocation5 + $0x270] sm:$0xff]
    %v118 = vld [vmem:[#allocation5 + $0x278] sm:$0xff]
    %v119 = vld [vmem:[#allocation5 + $0x280] sm:$0xff]
    %v120 = vld [vmem:[#allocation5 + $0x288] sm:$0xff]
    %v121 = vld [vmem:[#allocation5 + $0x290] sm:$0xff]
    %v122 = vld [vmem:[#allocation5 + $0x298] sm:$0xff]
    %v123 = vld [vmem:[#allocation5 + $0x2a0] sm:$0xff]
    %v124 = vld [vmem:[#allocation5 + $0x2a8] sm:$0xff]
    %v125 = vld [vmem:[#allocation5 + $0x2b0] sm:$0xff]
    %v126 = vld [vmem:[#allocation5 + $0x2b8] sm:$0xff]
    %v127 = vld [vmem:[#allocation5 + $0x2c0] sm:$0xff]
    %v128 = vld [vmem:[#allocation5 + $0x2c8] sm:$0xff]
    %v129 = vld [vmem:[#allocation5 + $0x2d0] sm:$0xff]
    %v130 = vld [vmem:[#allocation5 + $0x2d8] sm:$0xff]
    %v131 = vld [vmem:[#allocation5 + $0x2e0] sm:$0xff]
    %v132 = vld [vmem:[#allocation5 + $0x2e8] sm:$0xff]
    %v133 = vld [vmem:[#allocation5 + $0x2f0] sm:$0xff]
    %v134 = vld [vmem:[#allocation5 + $0x2f8] sm:$0xff]
    %v135 = vld [vmem:[#allocation5 + $0x300] sm:$0xff]
    %v136 = vld [vmem:[#allocation5 + $0x308] sm:$0xff]
    %v137 = vld [vmem:[#allocation5 + $0x310] sm:$0xff]
    %v138 = vld [vmem:[#allocation5 + $0x318] sm:$0xff]
    %v139 = vld [vmem:[#allocation5 + $0x320] sm:$0xff]
    %v140 = vld [vmem:[#allocation5 + $0x328] sm:$0xff]
    %v141 = vld [vmem:[#allocation5 + $0x330] sm:$0xff]
    %v142 = vld [vmem:[#allocation5 + $0x338] sm:$0xff]
    %v143 = vld [vmem:[#allocation5 + $0x340] sm:$0xff]
    %v144 = vld [vmem:[#allocation5 + $0x348] sm:$0xff]
    %v145 = vld [vmem:[#allocation5 + $0x350] sm:$0xff]
    %v146 = vld [vmem:[#allocation5 + $0x358] sm:$0xff]
    %v147 = vld [vmem:[#allocation5 + $0x360] sm:$0xff]
    %v148 = vld [vmem:[#allocation5 + $0x368] sm:$0xff]
    %v149 = vld [vmem:[#allocation5 + $0x370] sm:$0xff]
    %v150 = vld [vmem:[#allocation5 + $0x378] sm:$0xff]
    %v151 = vld [vmem:[#allocation5 + $0x380] sm:$0xff]
    %v152 = vld [vmem:[#allocation5 + $0x388] sm:$0xff]
    %v153 = vld [vmem:[#allocation5 + $0x390] sm:$0xff]
    %v154 = vld [vmem:[#allocation5 + $0x398] sm:$0xff]
    %v155 = vld [vmem:[#allocation5 + $0x3a0] sm:$0xff]
    %v156 = vld [vmem:[#allocation5 + $0x3a8] sm:$0xff]
    %v157 = vld [vmem:[#allocation5 + $0x3b0] sm:$0xff]
    %v158 = vld [vmem:[#allocation5 + $0x3b8] sm:$0xff]
    %v159 = vld [vmem:[#allocation5 + $0x3c0] sm:$0xff]
    %v160 = vld [vmem:[#allocation5 + $0x3c8] sm:$0xff]
    %v161 = vld [vmem:[#allocation5 + $0x3d0] sm:$0xff]
    %v162 = vld [vmem:[#allocation5 + $0x3d8] sm:$0xff]
    %v163 = vld [vmem:[#allocation5 + $0x3e0] sm:$0xff]
    %v164 = vld [vmem:[#allocation5 + $0x3e8] sm:$0xff]
    %v165 = vld [vmem:[#allocation5 + $0x3f0] sm:$0xff]
    %v166 = vld [vmem:[#allocation5 + $0x3f8] sm:$0xff]
    %v167 = vld [vmem:[#allocation5 + $0x400] sm:$0xff]
    %v168 = vld [vmem:[#allocation5 + $0x408] sm:$0xff]
    %v169 = vld [vmem:[#allocation5 + $0x410] sm:$0xff]
    %v170 = vld [vmem:[#allocation5 + $0x418] sm:$0xff]
    %v171 = vld [vmem:[#allocation5 + $0x420] sm:$0xff]
    %v172 = vld [vmem:[#allocation5 + $0x428] sm:$0xff]
    %v173 = vld [vmem:[#allocation5 + $0x430] sm:$0xff]
    %v174 = vld [vmem:[#allocation5 + $0x438] sm:$0xff]
    %v175 = vld [vmem:[#allocation5 + $0x440] sm:$0xff]
    %v176 = vld [vmem:[#allocation5 + $0x448] sm:$0xff]
    %v177 = vld [vmem:[#allocation5 + $0x450] sm:$0xff]
    %v178 = vld [vmem:[#allocation5 + $0x458] sm:$0xff]
    %v179 = vld [vmem:[#allocation5 + $0x460] sm:$0xff]
    %v180 = vld [vmem:[#allocation5 + $0x468] sm:$0xff]
    %v181 = vld [vmem:[#allocation5 + $0x470] sm:$0xff]
    %v182 = vld [vmem:[#allocation5 + $0x478] sm:$0xff]
    %v183 = vld [vmem:[#allocation5 + $0x480] sm:$0xff]
    %v184 = vld [vmem:[#allocation5 + $0x488] sm:$0xff]
    %v185 = vld [vmem:[#allocation5 + $0x490] sm:$0xff]
    %v186 = vld [vmem:[#allocation5 + $0x498] sm:$0xff]
    %v187 = vld [vmem:[#allocation5 + $0x4a0] sm:$0xff]
    %v188 = vld [vmem:[#allocation5 + $0x4a8] sm:$0xff]
    %v189 = vld [vmem:[#allocation5 + $0x4b0] sm:$0xff]
    %v190 = vld [vmem:[#allocation5 + $0x4b8] sm:$0xff]
    %v191 = vld [vmem:[#allocation5 + $0x4c0] sm:$0xff]
    %v192 = vld [vmem:[#allocation5 + $0x4c8] sm:$0xff]
    %v193 = vld [vmem:[#allocation5 + $0x4d0] sm:$0xff]
    %v194 = vld [vmem:[#allocation5 + $0x4d8] sm:$0xff]
    %v195 = vld [vmem:[#allocation5 + $0x4e0] sm:$0xff]
    %v196 = vld [vmem:[#allocation5 + $0x4e8] sm:$0xff]
    %v197 = vld [vmem:[#allocation5 + $0x4f0] sm:$0xff]
    %v198 = vld [vmem:[#allocation5 + $0x4f8] sm:$0xff]
    %v199 = vld [vmem:[#allocation5 + $0x500] sm:$0xff]
    %v200 = vld [vmem:[#allocation5 + $0x508] sm:$0xff]
    %v201 = vld [vmem:[#allocation5 + $0x510] sm:$0xff]
    %v202 = vld [vmem:[#allocation5 + $0x518] sm:$0xff]
    %v203 = vld [vmem:[#allocation5 + $0x520] sm:$0xff]
    %v204 = vld [vmem:[#allocation5 + $0x528] sm:$0xff]
    %v205 = vld [vmem:[#allocation5 + $0x530] sm:$0xff]
    %v206 = vld [vmem:[#allocation5 + $0x538] sm:$0xff]
    %v207 = vld [vmem:[#allocation5 + $0x540] sm:$0xff]
    %v208 = vld [vmem:[#allocation5 + $0x548] sm:$0xff]
    %v209 = vld [vmem:[#allocation5 + $0x550] sm:$0xff]
    %v210 = vld [vmem:[#allocation5 + $0x558] sm:$0xff]
    %v211 = vld [vmem:[#allocation5 + $0x560] sm:$0xff]
    %v212 = vld [vmem:[#allocation5 + $0x568] sm:$0xff]
    %v213 = vld [vmem:[#allocation5 + $0x570] sm:$0xff]
    %v214 = vld [vmem:[#allocation5 + $0x578] sm:$0xff]
    %v215 = vld [vmem:[#allocation5 + $0x580] sm:$0xff]
    %v216 = vld [vmem:[#allocation5 + $0x588] sm:$0xff]
    %v217 = vld [vmem:[#allocation5 + $0x590] sm:$0xff]
    %v218 = vld [vmem:[#allocation5 + $0x598] sm:$0xff]
    %v219 = vld [vmem:[#allocation5 + $0x5a0] sm:$0xff]
    %v220 = vld [vmem:[#allocation5 + $0x5a8] sm:$0xff]
    %v221 = vld [vmem:[#allocation5 + $0x5b0] sm:$0xff]
    %v222 = vld [vmem:[#allocation5 + $0x5b8] sm:$0xff]
    %v223 = vld [vmem:[#allocation5 + $0x5c0] sm:$0xff]
    %v224 = vld [vmem:[#allocation5 + $0x5c8] sm:$0xff]
    %v225 = vld [vmem:[#allocation5 + $0x5d0] sm:$0xff]
    %v226 = vld [vmem:[#allocation5 + $0x5d8] sm:$0xff]
    %v227 = vld [vmem:[#allocation5 + $0x5e0] sm:$0xff]
    %v228 = vld [vmem:[#allocation5 + $0x5e8] sm:$0xff]
    %v229 = vld [vmem:[#allocation5 + $0x5f0] sm:$0xff]
    %v230 = vld [vmem:[#allocation5 + $0x5f8] sm:$0xff]
    %v231 = vld [vmem:[#allocation5 + $0x600] sm:$0xff]
    %v232 = vld [vmem:[#allocation5 + $0x608] sm:$0xff]
    %v233 = vld [vmem:[#allocation5 + $0x610] sm:$0xff]
    %v234 = vld [vmem:[#allocation5 + $0x618] sm:$0xff]
    %v235 = vld [vmem:[#allocation5 + $0x620] sm:$0xff]
    %v236 = vld [vmem:[#allocation5 + $0x628] sm:$0xff]
    %v237 = vld [vmem:[#allocation5 + $0x630] sm:$0xff]
    %v238 = vld [vmem:[#allocation5 + $0x638] sm:$0xff]
    %v239 = vld [vmem:[#allocation5 + $0x640] sm:$0xff]
    %v240 = vld [vmem:[#allocation5 + $0x648] sm:$0xff]
    %v241 = vld [vmem:[#allocation5 + $0x650] sm:$0xff]
    %v242 = vld [vmem:[#allocation5 + $0x658] sm:$0xff]
    %v243 = vld [vmem:[#allocation5 + $0x660] sm:$0xff]
    %v244 = vld [vmem:[#allocation5 + $0x668] sm:$0xff]
    %v245 = vld [vmem:[#allocation5 + $0x670] sm:$0xff]
    %v246 = vld [vmem:[#allocation5 + $0x678] sm:$0xff]
    %v247 = vld [vmem:[#allocation5 + $0x680] sm:$0xff]
    %v248 = vld [vmem:[#allocation5 + $0x688] sm:$0xff]
    %v249 = vld [vmem:[#allocation5 + $0x690] sm:$0xff]
    %v250 = vld [vmem:[#allocation5 + $0x698] sm:$0xff]
    %v251 = vld [vmem:[#allocation5 + $0x6a0] sm:$0xff]
    %v252 = vld [vmem:[#allocation5 + $0x6a8] sm:$0xff]
    %v253 = vld [vmem:[#allocation5 + $0x6b0] sm:$0xff]
    %v254 = vld [vmem:[#allocation5 + $0x6b8] sm:$0xff]
    %v255 = vld [vmem:[#allocation5 + $0x6c0] sm:$0xff]
    %v256 = vld [vmem:[#allocation5 + $0x6c8] sm:$0xff]
    %v257 = vld [vmem:[#allocation5 + $0x6d0] sm:$0xff]
    %v258 = vld [vmem:[#allocation5 + $0x6d8] sm:$0xff]
    %v259 = vld [vmem:[#allocation5 + $0x6e0] sm:$0xff]
    %v260 = vld [vmem:[#allocation5 + $0x6e8] sm:$0xff]
    %v261 = vld [vmem:[#allocation5 + $0x6f0] sm:$0xff]
    %v262 = vld [vmem:[#allocation5 + $0x6f8] sm:$0xff]
    %v263 = vld [vmem:[#allocation5 + $0x700] sm:$0xff]
    %v264 = vld [vmem:[#allocation5 + $0x708] sm:$0xff]
    %v265 = vld [vmem:[#allocation5 + $0x710] sm:$0xff]
    %v266 = vld [vmem:[#allocation5 + $0x718] sm:$0xff]
    %v267 = vld [vmem:[#allocation5 + $0x720] sm:$0xff]
    %v268 = vld [vmem:[#allocation5 + $0x728] sm:$0xff]
    %v269 = vld [vmem:[#allocation5 + $0x730] sm:$0xff]
    %v270 = vld [vmem:[#allocation5 + $0x738] sm:$0xff]
    %v271 = vld [vmem:[#allocation5 + $0x740] sm:$0xff]
    %v272 = vld [vmem:[#allocation5 + $0x748] sm:$0xff]
    %v273 = vld [vmem:[#allocation5 + $0x750] sm:$0xff]
    %v274 = vld [vmem:[#allocation5 + $0x758] sm:$0xff]
    %v275 = vld [vmem:[#allocation5 + $0x760] sm:$0xff]
    %v276 = vld [vmem:[#allocation5 + $0x768] sm:$0xff]
    %v277 = vld [vmem:[#allocation5 + $0x770] sm:$0xff]
    %v278 = vld [vmem:[#allocation5 + $0x778] sm:$0xff]
    %v279 = vld [vmem:[#allocation5 + $0x780] sm:$0xff]
    %v280 = vld [vmem:[#allocation5 + $0x788] sm:$0xff]
    %v281 = vld [vmem:[#allocation5 + $0x790] sm:$0xff]
    %v282 = vld [vmem:[#allocation5 + $0x798] sm:$0xff]
    %v283 = vld [vmem:[#allocation5 + $0x7a0] sm:$0xff]
    %v284 = vld [vmem:[#allocation5 + $0x7a8] sm:$0xff]
    %v285 = vld [vmem:[#allocation5 + $0x7b0] sm:$0xff]
    %v286 = vld [vmem:[#allocation5 + $0x7b8] sm:$0xff]
    %v287 = vld [vmem:[#allocation5 + $0x7c0] sm:$0xff]
    %v288 = vld [vmem:[#allocation5 + $0x7c8] sm:$0xff]
    %v289 = vld [vmem:[#allocation5 + $0x7d0] sm:$0xff]
    %v290 = vld [vmem:[#allocation5 + $0x7d8] sm:$0xff]
    %v291 = vld [vmem:[#allocation5 + $0x7e0] sm:$0xff]
    %v292 = vld [vmem:[#allocation5 + $0x7e8] sm:$0xff]
    %v293 = vld [vmem:[#allocation5 + $0x7f0] sm:$0xff]
    %v294 = vld [vmem:[#allocation5 + $0x7f8] sm:$0xff]
    %v296 = vcombine.high %v38, %v38
    %v298 = vunpack.c.l.s4 1983009808
    %v299 = vunpack.c.0.s8 %v298
    %v300 = vlaneseq
    %v301 = vshrl.u32 %v300, 7
    %v302 = vsub.s32 %v299, %v301
    %v303 = vrot.slane %v38, %v302
    %v305 = vunpack.c.l.s4 1983009808
    %v306 = vunpack.c.0.s8 %v305
    %v307 = vlaneseq
    %v308 = vshrl.u32 %v307, 7
    %v309 = vsub.s32 %v306, %v308
    %v310 = vrot.slane %v296, %v309
    %v311 = vcombine.high %v303, %v303
    %v312 = vcombine.high %v310, %v310
    %317 = vmatprep.subr.mxu0 %v100
    %318 = vmatpush1.msra.mxu0 %v99
    %319 = vmatprep.subr.mxu0 %v96
    %320 = vmatpush1.msra.mxu0 %v95
    %321 = vmatprep.subr.mxu0 %v92
    %322 = vmatpush1.msra.mxu0 %v91
    %323 = vmatprep.subr.mxu0 %v88
    %324 = vmatpush1.msra.mxu0 %v87
    %325 = vmatprep.subr.mxu0 %v84
    %326 = vmatpush1.msra.mxu0 %v83
    %327 = vmatprep.subr.mxu0 %v80
    %328 = vmatpush1.msra.mxu0 %v79
    %329 = vmatprep.subr.mxu0 %v76
    %330 = vmatpush1.msra.mxu0 %v75
    %331 = vmatprep.subr.mxu0 %v72
    %332 = vmatpush1.msra.mxu0 %v71
    %333 = vmatprep.subr.mxu0 %v68
    %334 = vmatpush1.msra.mxu0 %v67
    %335 = vmatprep.subr.mxu0 %v64
    %336 = vmatpush1.msra.mxu0 %v63
    %337 = vmatprep.subr.mxu0 %v60
    %338 = vmatpush1.msra.mxu0 %v59
    %339 = vmatprep.subr.mxu0 %v56
    %340 = vmatpush1.msra.mxu0 %v55
    %341 = vmatprep.subr.mxu0 %v52
    %342 = vmatpush1.msra.mxu0 %v51
    %343 = vmatprep.subr.mxu0 %v48
    %344 = vmatpush1.msra.mxu0 %v47
    %345 = vmatprep.subr.mxu0 %v44
    %346 = vmatpush1.msra.mxu0 %v43
    %347 = vmatprep.subr.mxu0 %v40
    %348 = vmatpush1.msra.mxu0 %v39
    %349 = vmatprep.subr.mxu0 %v164
    %350 = vmatpush2.msra.mxu0 %v163
    %351 = vmatprep.subr.mxu0 %v160
    %352 = vmatpush2.msra.mxu0 %v159
    %353 = vmatprep.subr.mxu0 %v156
    %354 = vmatpush2.msra.mxu0 %v155
    %355 = vmatprep.subr.mxu0 %v152
    %356 = vmatpush2.msra.mxu0 %v151
    %357 = vmatprep.subr.mxu0 %v148
    %358 = vmatpush2.msra.mxu0 %v147
    %359 = vmatprep.subr.mxu0 %v144
    %360 = vmatpush2.msra.mxu0 %v143
    %361 = vmatprep.subr.mxu0 %v140
    %362 = vmatpush2.msra.mxu0 %v139
    %363 = vmatprep.subr.mxu0 %v136
    %364 = vmatpush2.msra.mxu0 %v135
    %365 = vmatprep.subr.mxu0 %v132
    %366 = vmatpush2.msra.mxu0 %v131
    %367 = vmatprep.subr.mxu0 %v128
    %368 = vmatpush2.msra.mxu0 %v127
    %369 = vmatprep.subr.mxu0 %v124
    %370 = vmatpush2.msra.mxu0 %v123
    %371 = vmatprep.subr.mxu0 %v120
    %372 = vmatpush2.msra.mxu0 %v119
    %373 = vmatprep.subr.mxu0 %v116
    %374 = vmatpush2.msra.mxu0 %v115
    %375 = vmatprep.subr.mxu0 %v112
    %376 = vmatpush2.msra.mxu0 %v111
    %377 = vmatprep.subr.mxu0 %v108
    %378 = vmatpush2.msra.mxu0 %v107
    %379 = vmatprep.subr.mxu0 %v104
    %380 = vmatpush2.msra.mxu0 %v103
    %381 = vmatprep.mubr.f32.mxu0 %v311
    %382 = vmatmul.mubr.f32.gmra.mxu0 %v303
    %v383 = vpop.f32.mrf.mxu0
    %v384 = vadd.f32 0.0, %v383
    %v385 = vpop.f32.mrf.mxu0
    %v386 = vadd.f32 0.0, %v385
    %387 = vdwg.mxu0
    %388 = vmatprep.subr.mxu0 %v228
    %389 = vmatpush1.msra.mxu0 %v227
    %390 = vmatprep.subr.mxu0 %v224
    %391 = vmatpush1.msra.mxu0 %v223
    %392 = vmatprep.subr.mxu0 %v220
    %393 = vmatpush1.msra.mxu0 %v219
    %394 = vmatprep.subr.mxu0 %v216
    %395 = vmatpush1.msra.mxu0 %v215
    %396 = vmatprep.subr.mxu0 %v212
    %397 = vmatpush1.msra.mxu0 %v211
    %398 = vmatprep.subr.mxu0 %v208
    %399 = vmatpush1.msra.mxu0 %v207
    %400 = vmatprep.subr.mxu0 %v204
    %401 = vmatpush1.msra.mxu0 %v203
    %402 = vmatprep.subr.mxu0 %v200
    %403 = vmatpush1.msra.mxu0 %v199
    %404 = vmatprep.subr.mxu0 %v196
    %405 = vmatpush1.msra.mxu0 %v195
    %406 = vmatprep.subr.mxu0 %v192
    %407 = vmatpush1.msra.mxu0 %v191
    %408 = vmatprep.subr.mxu0 %v188
    %409 = vmatpush1.msra.mxu0 %v187
    %410 = vmatprep.subr.mxu0 %v184
    %411 = vmatpush1.msra.mxu0 %v183
    %412 = vmatprep.subr.mxu0 %v180
    %413 = vmatpush1.msra.mxu0 %v179
    %414 = vmatprep.subr.mxu0 %v176
    %415 = vmatpush1.msra.mxu0 %v175
    %416 = vmatprep.subr.mxu0 %v172
    %417 = vmatpush1.msra.mxu0 %v171
    %418 = vmatprep.subr.mxu0 %v168
    %419 = vmatpush1.msra.mxu0 %v167
    %420 = vmatprep.subr.mxu0 %v292
    %421 = vmatpush2.msra.mxu0 %v291
    %422 = vmatprep.subr.mxu0 %v288
    %423 = vmatpush2.msra.mxu0 %v287
    %424 = vmatprep.subr.mxu0 %v284
    %425 = vmatpush2.msra.mxu0 %v283
    %426 = vmatprep.subr.mxu0 %v280
    %427 = vmatpush2.msra.mxu0 %v279
    %428 = vmatprep.subr.mxu0 %v276
    %429 = vmatpush2.msra.mxu0 %v275
    %430 = vmatprep.subr.mxu0 %v272
    %431 = vmatpush2.msra.mxu0 %v271
    %432 = vmatprep.subr.mxu0 %v268
    %433 = vmatpush2.msra.mxu0 %v267
    %434 = vmatprep.subr.mxu0 %v264
    %435 = vmatpush2.msra.mxu0 %v263
    %436 = vmatprep.subr.mxu0 %v260
    %437 = vmatpush2.msra.mxu0 %v259
    %438 = vmatprep.subr.mxu0 %v256
    %439 = vmatpush2.msra.mxu0 %v255
    %440 = vmatprep.subr.mxu0 %v252
    %441 = vmatpush2.msra.mxu0 %v251
    %442 = vmatprep.subr.mxu0 %v248
    %443 = vmatpush2.msra.mxu0 %v247
    %444 = vmatprep.subr.mxu0 %v244
    %445 = vmatpush2.msra.mxu0 %v243
    %446 = vmatprep.subr.mxu0 %v240
    %447 = vmatpush2.msra.mxu0 %v239
    %448 = vmatprep.subr.mxu0 %v236
    %449 = vmatpush2.msra.mxu0 %v235
    %450 = vmatprep.subr.mxu0 %v232
    %451 = vmatpush2.msra.mxu0 %v231
    %452 = vmatprep.mubr.f32.mxu0 %v312
    %453 = vmatmul.mubr.f32.gmra.mxu0 %v310
    %v454 = vpop.f32.mrf.mxu0
    %v455 = vadd.f32 %v384, %v454
    %v456 = vpop.f32.mrf.mxu0
    %v457 = vadd.f32 %v386, %v456
    %458 = vdwg.mxu0
    %459 = vmatprep.subr.mxu0 %v102
    %460 = vmatpush1.msra.mxu0 %v101
    %461 = vmatprep.subr.mxu0 %v98
    %462 = vmatpush1.msra.mxu0 %v97
    %463 = vmatprep.subr.mxu0 %v94
    %464 = vmatpush1.msra.mxu0 %v93
    %465 = vmatprep.subr.mxu0 %v90
    %466 = vmatpush1.msra.mxu0 %v89
    %467 = vmatprep.subr.mxu0 %v86
    %468 = vmatpush1.msra.mxu0 %v85
    %469 = vmatprep.subr.mxu0 %v82
    %470 = vmatpush1.msra.mxu0 %v81
    %471 = vmatprep.subr.mxu0 %v78
    %472 = vmatpush1.msra.mxu0 %v77
    %473 = vmatprep.subr.mxu0 %v74
    %474 = vmatpush1.msra.mxu0 %v73
    %475 = vmatprep.subr.mxu0 %v70
    %476 = vmatpush1.msra.mxu0 %v69
    %477 = vmatprep.subr.mxu0 %v66
    %478 = vmatpush1.msra.mxu0 %v65
    %479 = vmatprep.subr.mxu0 %v62
    %480 = vmatpush1.msra.mxu0 %v61
    %481 = vmatprep.subr.mxu0 %v58
    %482 = vmatpush1.msra.mxu0 %v57
    %483 = vmatprep.subr.mxu0 %v54
    %484 = vmatpush1.msra.mxu0 %v53
    %485 = vmatprep.subr.mxu0 %v50
    %486 = vmatpush1.msra.mxu0 %v49
    %487 = vmatprep.subr.mxu0 %v46
    %488 = vmatpush1.msra.mxu0 %v45
    %489 = vmatprep.subr.mxu0 %v42
    %490 = vmatpush1.msra.mxu0 %v41
    %491 = vmatprep.subr.mxu0 %v166
    %492 = vmatpush2.msra.mxu0 %v165
    %493 = vmatprep.subr.mxu0 %v162
    %494 = vmatpush2.msra.mxu0 %v161
    %495 = vmatprep.subr.mxu0 %v158
    %496 = vmatpush2.msra.mxu0 %v157
    %497 = vmatprep.subr.mxu0 %v154
    %498 = vmatpush2.msra.mxu0 %v153
    %499 = vmatprep.subr.mxu0 %v150
    %500 = vmatpush2.msra.mxu0 %v149
    %501 = vmatprep.subr.mxu0 %v146
    %502 = vmatpush2.msra.mxu0 %v145
    %503 = vmatprep.subr.mxu0 %v142
    %504 = vmatpush2.msra.mxu0 %v141
    %505 = vmatprep.subr.mxu0 %v138
    %506 = vmatpush2.msra.mxu0 %v137
    %507 = vmatprep.subr.mxu0 %v134
    %508 = vmatpush2.msra.mxu0 %v133
    %509 = vmatprep.subr.mxu0 %v130
    %510 = vmatpush2.msra.mxu0 %v129
    %511 = vmatprep.subr.mxu0 %v126
    %512 = vmatpush2.msra.mxu0 %v125
    %513 = vmatprep.subr.mxu0 %v122
    %514 = vmatpush2.msra.mxu0 %v121
    %515 = vmatprep.subr.mxu0 %v118
    %516 = vmatpush2.msra.mxu0 %v117
    %517 = vmatprep.subr.mxu0 %v114
    %518 = vmatpush2.msra.mxu0 %v113
    %519 = vmatprep.subr.mxu0 %v110
    %520 = vmatpush2.msra.mxu0 %v109
    %521 = vmatprep.subr.mxu0 %v106
    %522 = vmatpush2.msra.mxu0 %v105
    %523 = vmatprep.mubr.f32.mxu0 %v311
    %524 = vmatmul.mubr.f32.gmra.mxu0 %v303
    %v525 = vpop.f32.mrf.mxu0
    %v526 = vadd.f32 0.0, %v525
    %v527 = vpop.f32.mrf.mxu0
    %v528 = vadd.f32 0.0, %v527
    %529 = vdwg.mxu0
    %530 = vmatprep.subr.mxu0 %v230
    %531 = vmatpush1.msra.mxu0 %v229
    %532 = vmatprep.subr.mxu0 %v226
    %533 = vmatpush1.msra.mxu0 %v225
    %534 = vmatprep.subr.mxu0 %v222
    %535 = vmatpush1.msra.mxu0 %v221
    %536 = vmatprep.subr.mxu0 %v218
    %537 = vmatpush1.msra.mxu0 %v217
    %538 = vmatprep.subr.mxu0 %v214
    %539 = vmatpush1.msra.mxu0 %v213
    %540 = vmatprep.subr.mxu0 %v210
    %541 = vmatpush1.msra.mxu0 %v209
    %542 = vmatprep.subr.mxu0 %v206
    %543 = vmatpush1.msra.mxu0 %v205
    %544 = vmatprep.subr.mxu0 %v202
    %545 = vmatpush1.msra.mxu0 %v201
    %546 = vmatprep.subr.mxu0 %v198
    %547 = vmatpush1.msra.mxu0 %v197
    %548 = vmatprep.subr.mxu0 %v194
    %549 = vmatpush1.msra.mxu0 %v193
    %550 = vmatprep.subr.mxu0 %v190
    %551 = vmatpush1.msra.mxu0 %v189
    %552 = vmatprep.subr.mxu0 %v186
    %553 = vmatpush1.msra.mxu0 %v185
    %554 = vmatprep.subr.mxu0 %v182
    %555 = vmatpush1.msra.mxu0 %v181
    %556 = vmatprep.subr.mxu0 %v178
    %557 = vmatpush1.msra.mxu0 %v177
    %558 = vmatprep.subr.mxu0 %v174
    %559 = vmatpush1.msra.mxu0 %v173
    %560 = vmatprep.subr.mxu0 %v170
    %561 = vmatpush1.msra.mxu0 %v169
    %562 = vmatprep.subr.mxu0 %v294
    %563 = vmatpush2.msra.mxu0 %v293
    %564 = vmatprep.subr.mxu0 %v290
    %565 = vmatpush2.msra.mxu0 %v289
    %566 = vmatprep.subr.mxu0 %v286
    %567 = vmatpush2.msra.mxu0 %v285
    %568 = vmatprep.subr.mxu0 %v282
    %569 = vmatpush2.msra.mxu0 %v281
    %570 = vmatprep.subr.mxu0 %v278
    %571 = vmatpush2.msra.mxu0 %v277
    %572 = vmatprep.subr.mxu0 %v274
    %573 = vmatpush2.msra.mxu0 %v273
    %574 = vmatprep.subr.mxu0 %v270
    %575 = vmatpush2.msra.mxu0 %v269
    %576 = vmatprep.subr.mxu0 %v266
    %577 = vmatpush2.msra.mxu0 %v265
    %578 = vmatprep.subr.mxu0 %v262
    %579 = vmatpush2.msra.mxu0 %v261
    %580 = vmatprep.subr.mxu0 %v258
    %581 = vmatpush2.msra.mxu0 %v257
    %582 = vmatprep.subr.mxu0 %v254
    %583 = vmatpush2.msra.mxu0 %v253
    %584 = vmatprep.subr.mxu0 %v250
    %585 = vmatpush2.msra.mxu0 %v249
    %586 = vmatprep.subr.mxu0 %v246
    %587 = vmatpush2.msra.mxu0 %v245
    %588 = vmatprep.subr.mxu0 %v242
    %589 = vmatpush2.msra.mxu0 %v241
    %590 = vmatprep.subr.mxu0 %v238
    %591 = vmatpush2.msra.mxu0 %v237
    %592 = vmatprep.subr.mxu0 %v234
    %593 = vmatpush2.msra.mxu0 %v233
    %594 = vmatprep.mubr.f32.mxu0 %v312
    %595 = vmatmul.mubr.f32.gmra.mxu0 %v310
    %v596 = vpop.f32.mrf.mxu0
    %v597 = vadd.f32 %v526, %v596
    %v598 = vpop.f32.mrf.mxu0
    %v599 = vadd.f32 %v528, %v598
    %600 = vdwg.mxu0
    %v605 = vcombine.low %v455, %v457
    %v606 = vcombine.low %v597, %v599
    %v608 = vunpack.c.l.s4 1983009808
    %v609 = vunpack.c.0.s8 %v608
    %v610 = vlaneseq
    %v611 = vshrl.u32 %v610, 7
    %v612 = vsub.s32 %v609, %v611
    %v613 = vrot.slane %v605, %v612
    %v615 = vunpack.c.l.s4 1983009808
    %v616 = vunpack.c.0.s8 %v615
    %v617 = vlaneseq
    %v618 = vshrl.u32 %v617, 7
    %v619 = vsub.s32 %v616, %v618
    %v620 = vrot.slane %v606, %v619
    %v621 = vcombine.low %v613, %v620
    %623 = vst [vmem:[#allocation7] sm:$0xff] %v621
    // Predicated region
    $region18: #{tpu_custom_call.1} parent=1 // pred_check
      _
    $region19: #{tpu_custom_call.1} parent=1 // pred_check_branch
      %625 = sbr.rel (0) target = $region21
    $region20: #{tpu_custom_call.1} parent=1 // pred_region
      %s627 = ssub.s32 128, 128
      %628 = vsyncadd [#allocation4], %s627
      %s630 = sshll.u32 [#allocation7], 4
      %s631 = int_to_ptr.vmem [resolvable:$true] %s630
      %633 = dma.vmem_to_hbm [thread:$0]  %s631, 128, %s2, [#allocation4]
    $region21: #{tpu_custom_call.1} parent=1 // pred_fallthru
      _
    // Predicated region
    $region22: #{tpu_custom_call.1} parent=1 // pred_check
      _
    $region23: #{tpu_custom_call.1} parent=1 // pred_check_branch
      %635 = sbr.rel (0) target = $region25
    $region24: #{tpu_custom_call.1} parent=1 // pred_region
      %636 = dma.done [#allocation4], 128
    $region25: #{tpu_custom_call.1} parent=1 // pred_fallthru
      _
    %637 = vsyncpa [#allocation3], 1
    %638 = vsyncpa [#allocation6], 1
    %639 = vsyncpa [#allocation4], 1

</llo_original>
